<compile_context>
chip_gen: v7x
topology: tpu7x:2x2x1
jax: 0.10.0
libtpu: 0.0.40
codegen_flags: <defaults>
</compile_context>

<pallas_src>
import numpy as np
import jax
import jax.numpy as jnp
from jax.experimental import pallas as pl
from jax.experimental.pallas import tpu as pltpu


def _const_params_kernel(w_ref, out_ref):
    """w_ref: (1, W) f32 anneal_weights row.  out_ref: (B, 2) f32.

    out[:, 0] = softplus(w[0, 0])  (beta,  broadcast over batch)
    out[:, 1] = softplus(w[0, 1])  (alpha, broadcast over batch)
    """
    w = w_ref[...]                       # (1, W)
    raw = w[:, 0:2]                      # (1, 2): [beta_raw, alpha_raw]
    # numerically-stable softplus: max(x, 0) + log(1 + exp(-|x|))
    sp = jnp.maximum(raw, 0.0) + jnp.log(1.0 + jnp.exp(-jnp.abs(raw)))
    out_ref[...] = jnp.broadcast_to(sp, out_ref.shape)   # sublane broadcast to (B, 2)


def parameter_prediction_net_constant(anneal_weights, x):
    """Pallas forward of ParameterPredictionNetConstant.

    anneal_weights: (2 + prod(weights_dim),) learnable parameter vector.
    x: list/tuple of point-cloud arrays; only x[0].shape[0] (batch size) is
       used, exactly as in the torch module (the gating-weight tail of
       anneal_weights is not returned by forward, matching the torch code).
    Returns (beta, alpha), each of shape (B,).
    """
    batch_size = x[0].shape[0]
    w2d = jnp.asarray(anneal_weights, jnp.float32).reshape(1, -1)
    W = w2d.shape[1]

    out = pl.pallas_call(
        _const_params_kernel,
        out_shape=jax.ShapeDtypeStruct((batch_size, 2), jnp.float32),
        grid=(1,),
        in_specs=[pl.BlockSpec((1, W), lambda i: (0, 0))],
        out_specs=pl.BlockSpec((batch_size, 2), lambda i: (0, 0)),
        compiler_params=pltpu.CompilerParams(dimension_semantics=("arbitrary",)),
    )(w2d)

    return out[:, 0], out[:, 1]


if __name__ == "__main__":
    # small shapes consistent with how RPMNet feeds this module
    B, J, K = 2, 8, 16
    weights_dim = (4,)                        # gating-weight dims (unused in forward)
    n_params = 2 + int(np.prod(weights_dim))

    key = jax.random.PRNGKey(0)
    kw, ks, kr = jax.random.split(key, 3)
    # torch initializes anneal_weights to zeros; use small random values so the
    # numerical check is non-degenerate (zeros -> softplus(0) = log 2 everywhere).
    anneal_weights = 0.5 * jax.random.normal(kw, (n_params,), jnp.float32)
    points_src = jax.random.normal(ks, (B, J, 6), jnp.float32)
    points_ref = jax.random.normal(kr, (B, K, 6), jnp.float32)
    x = [points_src, points_ref]

    beta, alpha = parameter_prediction_net_constant(anneal_weights, x)
    beta = jax.block_until_ready(beta)
    alpha = jax.block_until_ready(alpha)

    # plain-JAX reference mirroring the torch forward:
    #   beta  = F.softplus(raw_weights[0]).expand(B)
    #   alpha = F.softplus(raw_weights[1]).expand(B)
    ref_beta = jnp.broadcast_to(jax.nn.softplus(anneal_weights[0]), (B,))
    ref_alpha = jnp.broadcast_to(jax.nn.softplus(anneal_weights[1]), (B,))

    assert beta.shape == (B,) and alpha.shape == (B,)
    assert np.allclose(np.asarray(beta), np.asarray(ref_beta), rtol=1e-6, atol=1e-6)
    assert np.allclose(np.asarray(alpha), np.asarray(ref_alpha), rtol=1e-6, atol=1e-6)
    assert np.all(np.asarray(beta) > 0) and np.all(np.asarray(alpha) > 0)

    print("KERNEL_OK")
</pallas_src>

<mosaic_0001>
module attributes {stable_mosaic.version = 11 : i64} {
  func.func @_const_params_kernel(%arg0: i32, %arg1: memref<1x6xf32, #tpu.memory_space<vmem>>, %arg2: memref<2x2xf32, #tpu.memory_space<vmem>>) attributes {dimension_semantics = [#tpu.dimension_semantics<arbitrary>], iteration_bounds = array<i64: 1>, scalar_prefetch = 0 : i64, scratch_operands = 0 : i64, tpu.core_type = #tpu.core_type<tc>, window_params = [{pipeline_mode = #tpu.pipeline_mode<synchronous>, transform_indices = @transform_0, window_bounds = array<i64: 1, 6>}, {pipeline_mode = #tpu.pipeline_mode<synchronous>, transform_indices = @transform_1, window_bounds = array<i64: 2, 2>}]} {
    %c0 = arith.constant 0 : index
    %c0_0 = arith.constant 0 : index
    %0 = vector.load %arg1[%c0, %c0_0] : memref<1x6xf32, #tpu.memory_space<vmem>>, vector<1x6xf32>
    %1 = vector.extract_strided_slice %0 {offsets = [0, 0], sizes = [1, 2], strides = [1, 1]} : vector<1x6xf32> to vector<1x2xf32>
    %cst = arith.constant 0.000000e+00 : f32
    %2 = vector.broadcast %cst : f32 to vector<1x2xf32>
    %3 = arith.maximumf %1, %2 : vector<1x2xf32>
    %4 = math.absf %1 : vector<1x2xf32>
    %cst_1 = arith.constant 0.000000e+00 : f32
    %5 = vector.broadcast %cst_1 : f32 to vector<1x2xf32>
    %6 = arith.subf %5, %4 : vector<1x2xf32>
    %7 = math.exp %6 : vector<1x2xf32>
    %cst_2 = arith.constant 1.000000e+00 : f32
    %8 = vector.broadcast %cst_2 : f32 to vector<1x2xf32>
    %9 = arith.addf %8, %7 : vector<1x2xf32>
    %10 = math.log %9 : vector<1x2xf32>
    %11 = arith.addf %3, %10 : vector<1x2xf32>
    %12 = vector.shape_cast %11 : vector<1x2xf32> to vector<1x2xf32>
    %13 = vector.broadcast %12 : vector<1x2xf32> to vector<2x2xf32>
    %c0_3 = arith.constant 0 : index
    %c0_4 = arith.constant 0 : index
    %14 = vector.load %arg2[%c0_3, %c0_4] : memref<2x2xf32, #tpu.memory_space<vmem>>, vector<2x2xf32>
    tpu.vector_store %arg2[%c0_3, %c0_4], %13 {strides = array<i32>} : memref<2x2xf32, #tpu.memory_space<vmem>>, vector<2x2xf32>,
    return
  }
  func.func @transform_0(%arg0: i32) -> (i32, i32) {
    %c0_i32 = arith.constant 0 : i32
    %c0_i32_0 = arith.constant 0 : i32
    %c0_i32_1 = arith.constant 0 : i32
    return %c0_i32, %c0_i32_0 : i32, i32
  }
  func.func @transform_1(%arg0: i32) -> (i32, i32) {
    %c0_i32 = arith.constant 0 : i32
    %c0_i32_0 = arith.constant 0 : i32
    %c0_i32_1 = arith.constant 0 : i32
    return %c0_i32, %c0_i32_0 : i32, i32
  }
}

</mosaic_0001>

<llo_original>
// kernel: tpu_custom_call.1
$region0: #{tpu_custom_call.1}
  #allocation0 [shape = 'u32[]', space=smem, size = 0x4, offset = 0x4, fixed_abs, tag = 'smem constant byte address 0x4 - core index']
  #allocation1 [shape = 'u32[144,128]{1,0:T(1,128)}', space=vmem, size = 0x12000, scoped, tag = 'internal scratch']
  %s0 = inlined_call_operand.hbm [shape: f32[1,6], index: 0, kind: input, shape index: {}]
  %s1 = inlined_call_operand.hbm [shape: f32[2,2], index: 1, kind: output, shape index: {}]
  %s2 = sld [smem:[#allocation0]]
  $region18: #{tpu_custom_call.1} parent=0
    _
  %s4 = ssub.s32 1, %s2
  %s5 = scalar_select 0, %s4, %s2
  $region1: #{tpu_custom_call.1} parent=0
    #allocation2 [shape = 'u8[512]{0}', space=vmem, size = 0x400, scoped, tag = 'input window, operand 0, single buffered']
    #allocation3 [shape = 's32[1]{0}', space=sflag, size = 0x4, scoped, tag = 'scoped memory for tpu_custom_call.1']
    #allocation4 [shape = 's32[1]{0}', space=sflag, size = 0x4, scoped, tag = 'scoped memory for tpu_custom_call.1']
    #allocation5 [shape = 'u8[1024]{0}', space=vmem, size = 0x400, scoped, tag = 'output window, operand 0, single buffered']
    %6 = vsyncpa [#allocation3], 0
    %7 = vsyncpa [#allocation4], 0
    // Predicated region
    $region2: #{tpu_custom_call.1} parent=1 // pred_check
      _
    $region3: #{tpu_custom_call.1} parent=1 // pred_check_branch
      %9 = sbr.rel (0) target = $region5
    $region4: #{tpu_custom_call.1} parent=1 // pred_region
      %s11 = ssub.s32 16, 16
      %12 = vsyncadd [#allocation3], %s11
      %s14 = sshll.u32 [#allocation2], 4
      %s15 = int_to_ptr.vmem [resolvable:$true] %s14
      %17 = dma.hbm_to_vmem [thread:$0]  %s0, 16, %s15, [#allocation3]
    $region5: #{tpu_custom_call.1} parent=1 // pred_fallthru
      _
    // Predicated region
    $region6: #{tpu_custom_call.1} parent=1 // pred_check
      _
    $region7: #{tpu_custom_call.1} parent=1 // pred_check_branch
      %19 = sbr.rel (0) target = $region9
    $region8: #{tpu_custom_call.1} parent=1 // pred_region
      %20 = dma.done [#allocation3], 16
    $region9: #{tpu_custom_call.1} parent=1 // pred_fallthru
      _
    %v21 = vld [vmem:[#allocation2] sm:$0x1]
    %v22 = vmax.f32 %v21, 0.0
    %v23 = vand.u32 2147483647, %v21
    %v24 = vsub.f32 0.0, %v23
    %v25 = vmul.f32 %v24, 1.442695
    %v26 = vpow.pop %v25
    %v27 = vadd.f32 %v26, 1.0
    %v28 = vlog2.pop %v27
    %v29 = vmul.f32 %v28, 0.6931472
    %v30 = vadd.f32 %v22, %v29
    %v32 = vlaneseq
    %v33 = vshrl.u32 %v32, 7
    %v34 = vsub.s32 0, %v33
    %v35 = vrot.slane %v30, %v34
    %vm37 = vcmask 9216
    %38 = vst.msk [vmem:[#allocation5] sm:$0x3] %vm37, %v35
    // Predicated region
    $region10: #{tpu_custom_call.1} parent=1 // pred_check
      _
    $region11: #{tpu_custom_call.1} parent=1 // pred_check_branch
      %40 = sbr.rel (0) target = $region13
    $region12: #{tpu_custom_call.1} parent=1 // pred_region
      %s42 = ssub.s32 32, 32
      %43 = vsyncadd [#allocation4], %s42
      %s45 = sshll.u32 [#allocation5], 4
      %s46 = int_to_ptr.vmem [resolvable:$true] %s45
      %48 = dma.vmem_to_hbm [thread:$0]  %s46, 32, %s1, [#allocation4]
    $region13: #{tpu_custom_call.1} parent=1 // pred_fallthru
      _
    // Predicated region
    $region14: #{tpu_custom_call.1} parent=1 // pred_check
      _
    $region15: #{tpu_custom_call.1} parent=1 // pred_check_branch
      %50 = sbr.rel (0) target = $region17
    $region16: #{tpu_custom_call.1} parent=1 // pred_region
      %51 = dma.done [#allocation4], 32
    $region17: #{tpu_custom_call.1} parent=1 // pred_fallthru
      _
    %52 = vsyncpa [#allocation3], 1
    %53 = vsyncpa [#allocation4], 1

</llo_original>
